<compile_context>
chip_gen: v5e
topology: v5e:2x2
jax: 0.10.0
libtpu: 0.0.40
codegen_flags: <defaults>
</compile_context>

<pallas_src>
import functools

import jax
import jax.numpy as jnp
from jax import lax
from jax.experimental import pallas as pl
from jax.experimental.pallas import tpu as pltpu


def _stn_kernel(theta_ref, img_ref, out_ref, *, H, W, C, T):
    # theta_ref: SMEM (N*6,)        -- row-major 2x3 affine matrices, flattened
    # img_ref:   VMEM (1, C*H, W)   -- one batch element, rows = (c, i), cols = j
    # out_ref:   VMEM (1, C, T)     -- one output-pixel tile (lane-dense)
    n = pl.program_id(0)
    t = pl.program_id(1)
    Wf, Hf = float(W), float(H)

    base = n * 6
    t00 = theta_ref[base + 0]
    t01 = theta_ref[base + 1]
    t02 = theta_ref[base + 2]
    t10 = theta_ref[base + 3]
    t11 = theta_ref[base + 4]
    t12 = theta_ref[base + 5]

    # Fused affine_grid (align_corners=False) + grid_sample unnormalization:
    #   ix = ax * j_out + bx * i_out + cx ;  iy = ay * j_out + by * i_out + cy
    ax = t00
    bx = (Wf / Hf) * t01
    cx = 0.5 * (t00 * (1.0 - Wf) + t01 * (Wf / Hf - Wf) + Wf * t02 + (Wf - 1.0))
    ay = (Hf / Wf) * t10
    by = t11
    cy = 0.5 * (t10 * (Hf / Wf - Hf) + t11 * (1.0 - Hf) + Hf * t12 + (Hf - 1.0))

    # Output-pixel (lane) coordinates for this tile.
    p = t * T + lax.broadcasted_iota(jnp.int32, (1, T), 1)
    if W > 0 and (W & (W - 1)) == 0:
        # power-of-two width: shift/mask instead of VPU div/mod
        shift = W.bit_length() - 1
        j_out = (p & (W - 1)).astype(jnp.float32)
        i_out = (p >> shift).astype(jnp.float32)
    else:
        j_out = (p % W).astype(jnp.float32)
        i_out = (p // W).astype(jnp.float32)

    ix = ax * j_out + bx * i_out + cx          # (1, T) source x coordinate
    iy = ay * j_out + by * i_out + cy          # (1, T) source y coordinate

    x0f = jnp.floor(ix)
    y0f = jnp.floor(iy)
    wx1 = ix - x0f
    wx0 = 1.0 - wx1
    wy1 = iy - y0f
    wy0 = 1.0 - wy1

    # Zeros padding: fold per-corner validity into the (1, T) weight rows.
    wx0 = jnp.where((x0f >= 0.0) & (x0f <= Wf - 1.0), wx0, 0.0)
    wx1 = jnp.where((x0f >= -1.0) & (x0f <= Wf - 2.0), wx1, 0.0)
    wy0 = jnp.where((y0f >= 0.0) & (y0f <= Hf - 1.0), wy0, 0.0)
    wy1 = jnp.where((y0f >= -1.0) & (y0f <= Hf - 2.0), wy1, 0.0)

    # Clamp before the int cast (out-of-range corners already have zero weight,
    # clamping only protects the float->int conversion).
    x0 = jnp.clip(x0f, -1.0, Wf).astype(jnp.int32)
    y0 = jnp.clip(y0f, -1.0, Hf).astype(jnp.int32)
    x1 = x0 + 1
    y1 = y0 + 1

    # Separable weight tables (x0 != x1 and y0 != y1, so the adds never overlap).
    jg = lax.broadcasted_iota(jnp.int32, (W, T), 0)
    xw = jnp.where(jg == x0, wx0, 0.0) + jnp.where(jg == x1, wx1, 0.0)   # (W, T)
    ig = lax.broadcasted_iota(jnp.int32, (H, T), 0)
    yw = jnp.where(ig == y0, wy0, 0.0) + jnp.where(ig == y1, wy1, 0.0)   # (H, T)

    # Stage 1: contract over source columns on the MXU (M = C*H).
    img = img_ref[0].astype(jnp.float32)                                 # (C*H, W)
    tmp = jnp.dot(img, xw, preferred_element_type=jnp.float32)           # (C*H, T)

    # Stage 2: Yw-weighted reduce over source rows (VPU mul + sublane reduce).
    if H % 8 == 0:
        out = jnp.sum(tmp.reshape(C, H, T) * yw[None, :, :], axis=1)     # (C, T)
    else:
        rows = [jnp.sum(tmp[c * H:(c + 1) * H, :] * yw, axis=0, keepdims=True)
                for c in range(C)]
        out = jnp.concatenate(rows, axis=0)                              # (C, T)

    out_ref[0] = out.astype(out_ref.dtype)


def transformation_2d(img, matrix_2d):
    """Forward pass of transformation_2D (affine_grid + grid_sample, zeros pad).

    img:       (N, C, H, W) float32 (NCHW, like PyTorch)
    matrix_2d: (N, 2, 3) float32 affine matrices
    returns:   (N, C, H, W) float32
    """
    N, C, H, W = img.shape
    HW = H * W
    # Pad the output spatial axis to a multiple of 128 so stores stay lane-dense;
    # padded output pixels are computed (cheap) and sliced off afterwards.
    HWp = ((HW + 127) // 128) * 128

    img_2d = img.reshape(N, C * H, W)                   # rows = (c, i), cols = j
    theta_flat = matrix_2d.reshape(N * 6).astype(jnp.float32)   # flat 1-D for SMEM

    # Output-pixel tile width (lanes).  Small images: one fat tile per batch
    # element (avoids per-grid-step overhead).  Larger images: 256 to fill the
    # 256-wide MXU N dim on v6e/v7x (fine on v5e too).
    if HWp <= 512:
        T = HWp
    elif HWp % 256 == 0:
        T = 256
    else:
        T = 128
    num_t = HWp // T

    kernel = functools.partial(_stn_kernel, H=H, W=W, C=C, T=T)
    out_flat = pl.pallas_call(
        kernel,
        out_shape=jax.ShapeDtypeStruct((N, C, HWp), img.dtype),
        grid_spec=pltpu.PrefetchScalarGridSpec(
            num_scalar_prefetch=0,
            grid=(N, num_t),
            in_specs=[
                pl.BlockSpec(memory_space=pltpu.MemorySpace.SMEM),        # theta (N*6,)
                pl.BlockSpec((1, C * H, W), lambda n, t: (n, 0, 0)),      # image per batch
            ],
            out_specs=pl.BlockSpec((1, C, T), lambda n, t: (n, 0, t)),
        ),
        compiler_params=pltpu.CompilerParams(
            dimension_semantics=("parallel", "parallel"),
        ),
    )(theta_flat, img_2d)

    return out_flat[:, :, :HW].reshape(N, C, H, W)


def _reference(img, theta):
    """Pure-JAX reference of affine_grid + grid_sample (bilinear, zeros, align_corners=False)."""
    N, C, H, W = img.shape
    j = jnp.arange(W, dtype=jnp.float32)
    i = jnp.arange(H, dtype=jnp.float32)
    bx = jnp.broadcast_to(((2.0 * j + 1.0) / W - 1.0)[None, :], (H, W))
    by = jnp.broadcast_to(((2.0 * i + 1.0) / H - 1.0)[:, None], (H, W))
    gx = theta[:, 0, 0, None, None] * bx + theta[:, 0, 1, None, None] * by + theta[:, 0, 2, None, None]
    gy = theta[:, 1, 0, None, None] * bx + theta[:, 1, 1, None, None] * by + theta[:, 1, 2, None, None]
    ix = ((gx + 1.0) * W - 1.0) * 0.5
    iy = ((gy + 1.0) * H - 1.0) * 0.5
    x0 = jnp.floor(ix)
    y0 = jnp.floor(iy)
    wx1 = ix - x0
    wx0 = 1.0 - wx1
    wy1 = iy - y0
    wy0 = 1.0 - wy1

    img_flat = img.reshape(N, C, H * W)

    def gather(xi, yi):
        valid = (xi >= 0) & (xi < W) & (yi >= 0) & (yi < H)
        xc = jnp.clip(xi, 0, W - 1).astype(jnp.int32)
        yc = jnp.clip(yi, 0, H - 1).astype(jnp.int32)
        idx = (yc * W + xc).reshape(N, 1, H * W)
        g = jnp.take_along_axis(img_flat, idx, axis=2).reshape(N, C, H, W)
        return g * valid[:, None, :, :].astype(img.dtype)

    out = (gather(x0, y0) * (wx0 * wy0)[:, None]
           + gather(x0 + 1, y0) * (wx1 * wy0)[:, None]
           + gather(x0, y0 + 1) * (wx0 * wy1)[:, None]
           + gather(x0 + 1, y0 + 1) * (wx1 * wy1)[:, None])
    return out


if __name__ == "__main__":
    key = jax.random.PRNGKey(0)
    k_img, k_theta = jax.random.split(key)

    N, C, H, W = 2, 4, 16, 16
    img = jax.random.normal(k_img, (N, C, H, W), dtype=jnp.float32)
    identity = jnp.array([[1.0, 0.0, 0.0], [0.0, 1.0, 0.0]], jnp.float32)
    matrix_2d = jnp.tile(identity[None], (N, 1, 1)) + 0.1 * jax.random.normal(
        k_theta, (N, 2, 3), dtype=jnp.float32)

    out = transformation_2d(img, matrix_2d)
    out = jax.block_until_ready(out)

    ref = _reference(img, matrix_2d)
    assert out.shape == (N, C, H, W)
    max_err = float(jnp.max(jnp.abs(out - ref)))
    assert bool(jnp.allclose(out, ref, atol=1e-4, rtol=1e-4)), (
        "max abs err = %f" % max_err)
    print("KERNEL_OK")
</pallas_src>

<mosaic_0001>
module attributes {stable_mosaic.version = 11 : i64} {
  func.func @_stn_kernel(%arg0: i32, %arg1: i32, %arg2: memref<12xf32, #tpu.memory_space<smem>>, %arg3: memref<1x64x16xf32, #tpu.memory_space<vmem>>, %arg4: memref<1x4x256xf32, #tpu.memory_space<vmem>>) attributes {dimension_semantics = [#tpu.dimension_semantics<parallel>, #tpu.dimension_semantics<parallel>], iteration_bounds = array<i64: 2, 1>, scalar_prefetch = 0 : i64, scratch_operands = 0 : i64, tpu.core_type = #tpu.core_type<tc>, window_params = [{transform_indices = @transform_0, window_bounds = array<i64: 12>}, {transform_indices = @transform_1, window_bounds = array<i64: 1, 64, 16>}, {transform_indices = @transform_2, window_bounds = array<i64: 1, 4, 256>}]} {
    %c6_i32 = arith.constant 6 : i32
    %0 = arith.muli %arg0, %c6_i32 : i32
    %c0_i32 = arith.constant 0 : i32
    %1 = arith.addi %0, %c0_i32 : i32
    %2 = arith.index_cast %1 : i32 to index
    %3 = memref.load %arg2[%2] : memref<12xf32, #tpu.memory_space<smem>>
    %c1_i32 = arith.constant 1 : i32
    %4 = arith.addi %0, %c1_i32 : i32
    %5 = arith.index_cast %4 : i32 to index
    %6 = memref.load %arg2[%5] : memref<12xf32, #tpu.memory_space<smem>>
    %c2_i32 = arith.constant 2 : i32
    %7 = arith.addi %0, %c2_i32 : i32
    %8 = arith.index_cast %7 : i32 to index
    %9 = memref.load %arg2[%8] : memref<12xf32, #tpu.memory_space<smem>>
    %c3_i32 = arith.constant 3 : i32
    %10 = arith.addi %0, %c3_i32 : i32
    %11 = arith.index_cast %10 : i32 to index
    %12 = memref.load %arg2[%11] : memref<12xf32, #tpu.memory_space<smem>>
    %c4_i32 = arith.constant 4 : i32
    %13 = arith.addi %0, %c4_i32 : i32
    %14 = arith.index_cast %13 : i32 to index
    %15 = memref.load %arg2[%14] : memref<12xf32, #tpu.memory_space<smem>>
    %c5_i32 = arith.constant 5 : i32
    %16 = arith.addi %0, %c5_i32 : i32
    %17 = arith.index_cast %16 : i32 to index
    %18 = memref.load %arg2[%17] : memref<12xf32, #tpu.memory_space<smem>>
    %cst = arith.constant 1.000000e+00 : f32
    %19 = arith.mulf %cst, %6 : f32
    %cst_0 = arith.constant -1.500000e+01 : f32
    %20 = arith.mulf %3, %cst_0 : f32
    %cst_1 = arith.constant -1.500000e+01 : f32
    %21 = arith.mulf %6, %cst_1 : f32
    %22 = arith.addf %20, %21 : f32
    %cst_2 = arith.constant 1.600000e+01 : f32
    %23 = arith.mulf %cst_2, %9 : f32
    %24 = arith.addf %22, %23 : f32
    %cst_3 = arith.constant 1.500000e+01 : f32
    %25 = arith.addf %24, %cst_3 : f32
    %cst_4 = arith.constant 5.000000e-01 : f32
    %26 = arith.mulf %cst_4, %25 : f32
    %cst_5 = arith.constant 1.000000e+00 : f32
    %27 = arith.mulf %cst_5, %12 : f32
    %cst_6 = arith.constant -1.500000e+01 : f32
    %28 = arith.mulf %12, %cst_6 : f32
    %cst_7 = arith.constant -1.500000e+01 : f32
    %29 = arith.mulf %15, %cst_7 : f32
    %30 = arith.addf %28, %29 : f32
    %cst_8 = arith.constant 1.600000e+01 : f32
    %31 = arith.mulf %cst_8, %18 : f32
    %32 = arith.addf %30, %31 : f32
    %cst_9 = arith.constant 1.500000e+01 : f32
    %33 = arith.addf %32, %cst_9 : f32
    %cst_10 = arith.constant 5.000000e-01 : f32
    %34 = arith.mulf %cst_10, %33 : f32
    %c256_i32 = arith.constant 256 : i32
    %35 = arith.muli %arg1, %c256_i32 : i32
    %36 = tpu.iota {dimensions = array<i32: 1>} : vector<1x256xi32>
    %37 = vector.broadcast %35 : i32 to vector<1x256xi32>
    %38 = arith.addi %37, %36 : vector<1x256xi32>
    %c15_i32 = arith.constant 15 : i32
    %39 = vector.broadcast %c15_i32 : i32 to vector<1x256xi32>
    %40 = arith.andi %38, %39 : vector<1x256xi32>
    %41 = arith.sitofp %40 : vector<1x256xi32> to vector<1x256xf32>
    %c4_i32_11 = arith.constant 4 : i32
    %42 = vector.broadcast %c4_i32_11 : i32 to vector<1x256xi32>
    %43 = arith.shrsi %38, %42 : vector<1x256xi32>
    %44 = arith.sitofp %43 : vector<1x256xi32> to vector<1x256xf32>
    %45 = vector.broadcast %3 : f32 to vector<1x256xf32>
    %46 = arith.mulf %45, %41 : vector<1x256xf32>
    %47 = vector.broadcast %19 : f32 to vector<1x256xf32>
    %48 = arith.mulf %47, %44 : vector<1x256xf32>
    %49 = arith.addf %46, %48 : vector<1x256xf32>
    %50 = vector.broadcast %26 : f32 to vector<1x256xf32>
    %51 = arith.addf %49, %50 : vector<1x256xf32>
    %52 = vector.broadcast %27 : f32 to vector<1x256xf32>
    %53 = arith.mulf %52, %41 : vector<1x256xf32>
    %54 = vector.broadcast %15 : f32 to vector<1x256xf32>
    %55 = arith.mulf %54, %44 : vector<1x256xf32>
    %56 = arith.addf %53, %55 : vector<1x256xf32>
    %57 = vector.broadcast %34 : f32 to vector<1x256xf32>
    %58 = arith.addf %56, %57 : vector<1x256xf32>
    %59 = math.floor %51 : vector<1x256xf32>
    %60 = math.floor %58 : vector<1x256xf32>
    %61 = arith.subf %51, %59 : vector<1x256xf32>
    %cst_12 = arith.constant 1.000000e+00 : f32
    %62 = vector.broadcast %cst_12 : f32 to vector<1x256xf32>
    %63 = arith.subf %62, %61 : vector<1x256xf32>
    %64 = arith.subf %58, %60 : vector<1x256xf32>
    %cst_13 = arith.constant 1.000000e+00 : f32
    %65 = vector.broadcast %cst_13 : f32 to vector<1x256xf32>
    %66 = arith.subf %65, %64 : vector<1x256xf32>
    %cst_14 = arith.constant 0.000000e+00 : f32
    %67 = vector.broadcast %cst_14 : f32 to vector<1x256xf32>
    %68 = arith.cmpf oge, %59, %67 : vector<1x256xf32>
    %cst_15 = arith.constant 1.500000e+01 : f32
    %69 = vector.broadcast %cst_15 : f32 to vector<1x256xf32>
    %70 = arith.cmpf ole, %59, %69 : vector<1x256xf32>
    %71 = arith.andi %68, %70 : vector<1x256xi1>
    %cst_16 = arith.constant 0.000000e+00 : f32
    %72 = vector.broadcast %cst_16 : f32 to vector<1x256xf32>
    %73 = arith.select %71, %63, %72 : vector<1x256xi1>, vector<1x256xf32>
    %cst_17 = arith.constant -1.000000e+00 : f32
    %74 = vector.broadcast %cst_17 : f32 to vector<1x256xf32>
    %75 = arith.cmpf oge, %59, %74 : vector<1x256xf32>
    %cst_18 = arith.constant 1.400000e+01 : f32
    %76 = vector.broadcast %cst_18 : f32 to vector<1x256xf32>
    %77 = arith.cmpf ole, %59, %76 : vector<1x256xf32>
    %78 = arith.andi %75, %77 : vector<1x256xi1>
    %cst_19 = arith.constant 0.000000e+00 : f32
    %79 = vector.broadcast %cst_19 : f32 to vector<1x256xf32>
    %80 = arith.select %78, %61, %79 : vector<1x256xi1>, vector<1x256xf32>
    %cst_20 = arith.constant 0.000000e+00 : f32
    %81 = vector.broadcast %cst_20 : f32 to vector<1x256xf32>
    %82 = arith.cmpf oge, %60, %81 : vector<1x256xf32>
    %cst_21 = arith.constant 1.500000e+01 : f32
    %83 = vector.broadcast %cst_21 : f32 to vector<1x256xf32>
    %84 = arith.cmpf ole, %60, %83 : vector<1x256xf32>
    %85 = arith.andi %82, %84 : vector<1x256xi1>
    %cst_22 = arith.constant 0.000000e+00 : f32
    %86 = vector.broadcast %cst_22 : f32 to vector<1x256xf32>
    %87 = arith.select %85, %66, %86 : vector<1x256xi1>, vector<1x256xf32>
    %cst_23 = arith.constant -1.000000e+00 : f32
    %88 = vector.broadcast %cst_23 : f32 to vector<1x256xf32>
    %89 = arith.cmpf oge, %60, %88 : vector<1x256xf32>
    %cst_24 = arith.constant 1.400000e+01 : f32
    %90 = vector.broadcast %cst_24 : f32 to vector<1x256xf32>
    %91 = arith.cmpf ole, %60, %90 : vector<1x256xf32>
    %92 = arith.andi %89, %91 : vector<1x256xi1>
    %cst_25 = arith.constant 0.000000e+00 : f32
    %93 = vector.broadcast %cst_25 : f32 to vector<1x256xf32>
    %94 = arith.select %92, %64, %93 : vector<1x256xi1>, vector<1x256xf32>
    %cst_26 = arith.constant -1.000000e+00 : f32
    %cst_27 = arith.constant 1.600000e+01 : f32
    %95 = vector.broadcast %cst_26 : f32 to vector<1x256xf32>
    %96 = arith.maximumf %95, %59 : vector<1x256xf32>
    %97 = vector.broadcast %cst_27 : f32 to vector<1x256xf32>
    %98 = arith.minimumf %97, %96 : vector<1x256xf32>
    %99 = arith.fptosi %98 : vector<1x256xf32> to vector<1x256xi32>
    %cst_28 = arith.constant -1.000000e+00 : f32
    %cst_29 = arith.constant 1.600000e+01 : f32
    %100 = vector.broadcast %cst_28 : f32 to vector<1x256xf32>
    %101 = arith.maximumf %100, %60 : vector<1x256xf32>
    %102 = vector.broadcast %cst_29 : f32 to vector<1x256xf32>
    %103 = arith.minimumf %102, %101 : vector<1x256xf32>
    %104 = arith.fptosi %103 : vector<1x256xf32> to vector<1x256xi32>
    %c1_i32_30 = arith.constant 1 : i32
    %105 = vector.broadcast %c1_i32_30 : i32 to vector<1x256xi32>
    %106 = arith.addi %99, %105 : vector<1x256xi32>
    %c1_i32_31 = arith.constant 1 : i32
    %107 = vector.broadcast %c1_i32_31 : i32 to vector<1x256xi32>
    %108 = arith.addi %104, %107 : vector<1x256xi32>
    %109 = tpu.iota {dimensions = array<i32: 0>} : vector<16x256xi32>
    %110 = vector.broadcast %99 : vector<1x256xi32> to vector<16x256xi32>
    %111 = arith.cmpi eq, %109, %110 : vector<16x256xi32>
    %cst_32 = arith.constant 0.000000e+00 : f32
    %112 = vector.shape_cast %73 : vector<1x256xf32> to vector<1x256xf32>
    %113 = vector.broadcast %112 : vector<1x256xf32> to vector<16x256xf32>
    %114 = vector.broadcast %cst_32 : f32 to vector<16x256xf32>
    %115 = arith.select %111, %113, %114 : vector<16x256xi1>, vector<16x256xf32>
    %116 = vector.broadcast %106 : vector<1x256xi32> to vector<16x256xi32>
    %117 = arith.cmpi eq, %109, %116 : vector<16x256xi32>
    %cst_33 = arith.constant 0.000000e+00 : f32
    %118 = vector.shape_cast %80 : vector<1x256xf32> to vector<1x256xf32>
    %119 = vector.broadcast %118 : vector<1x256xf32> to vector<16x256xf32>
    %120 = vector.broadcast %cst_33 : f32 to vector<16x256xf32>
    %121 = arith.select %117, %119, %120 : vector<16x256xi1>, vector<16x256xf32>
    %122 = arith.addf %115, %121 : vector<16x256xf32>
    %123 = tpu.iota {dimensions = array<i32: 0>} : vector<16x256xi32>
    %124 = vector.broadcast %104 : vector<1x256xi32> to vector<16x256xi32>
    %125 = arith.cmpi eq, %123, %124 : vector<16x256xi32>
    %cst_34 = arith.constant 0.000000e+00 : f32
    %126 = vector.shape_cast %87 : vector<1x256xf32> to vector<1x256xf32>
    %127 = vector.broadcast %126 : vector<1x256xf32> to vector<16x256xf32>
    %128 = vector.broadcast %cst_34 : f32 to vector<16x256xf32>
    %129 = arith.select %125, %127, %128 : vector<16x256xi1>, vector<16x256xf32>
    %130 = vector.broadcast %108 : vector<1x256xi32> to vector<16x256xi32>
    %131 = arith.cmpi eq, %123, %130 : vector<16x256xi32>
    %cst_35 = arith.constant 0.000000e+00 : f32
    %132 = vector.shape_cast %94 : vector<1x256xf32> to vector<1x256xf32>
    %133 = vector.broadcast %132 : vector<1x256xf32> to vector<16x256xf32>
    %134 = vector.broadcast %cst_35 : f32 to vector<16x256xf32>
    %135 = arith.select %131, %133, %134 : vector<16x256xi1>, vector<16x256xf32>
    %136 = arith.addf %129, %135 : vector<16x256xf32>
    %c0 = arith.constant 0 : index
    %c0_36 = arith.constant 0 : index
    %c0_37 = arith.constant 0 : index
    %137 = vector.load %arg3[%c0, %c0_36, %c0_37] : memref<1x64x16xf32, #tpu.memory_space<vmem>>, vector<1x64x16xf32>
    %138 = vector.shape_cast %137 : vector<1x64x16xf32> to vector<64x16xf32>
    %cst_38 = arith.constant dense<0.000000e+00> : vector<64x256xf32>
    %139 = tpu.matmul %138, %122, %cst_38 {dimension_numbers = #tpu.dot_dimension_numbers<[1], [0], [0], [1], [0, 0, 1, 1], [], []>} : vector<64x16xf32>, vector<16x256xf32>, vector<64x256xf32> -> vector<64x256xf32>
    %140 = vector.shape_cast %139 : vector<64x256xf32> to vector<4x16x256xf32>
    %141 = vector.shape_cast %136 : vector<16x256xf32> to vector<1x16x256xf32>
    %142 = vector.broadcast %141 : vector<1x16x256xf32> to vector<4x16x256xf32>
    %143 = arith.mulf %140, %142 : vector<4x16x256xf32>
    %cst_39 = arith.constant dense<0.000000e+00> : vector<4x256xf32>
    %144 = vector.multi_reduction <add>, %143, %cst_39 [1] : vector<4x16x256xf32> to vector<4x256xf32>
    %c0_40 = arith.constant 0 : index
    %c0_41 = arith.constant 0 : index
    %c0_42 = arith.constant 0 : index
    %145 = vector.load %arg4[%c0_40, %c0_41, %c0_42] : memref<1x4x256xf32, #tpu.memory_space<vmem>>, vector<1x4x256xf32>
    %146 = vector.shape_cast %145 : vector<1x4x256xf32> to vector<4x256xf32>
    %147 = vector.shape_cast %144 : vector<4x256xf32> to vector<1x4x256xf32>
    tpu.vector_store %arg4[%c0_40, %c0_41, %c0_42], %147 {strides = array<i32>} : memref<1x4x256xf32, #tpu.memory_space<vmem>>, vector<1x4x256xf32>,
    return
  }
  func.func @transform_0(%arg0: i32, %arg1: i32) -> i32 {
    %c0_i32 = arith.constant 0 : i32
    %c0_i32_0 = arith.constant 0 : i32
    return %c0_i32 : i32
  }
  func.func @transform_1(%arg0: i32, %arg1: i32) -> (i32, i32, i32) {
    %c0_i32 = arith.constant 0 : i32
    %c0_i32_0 = arith.constant 0 : i32
    %c0_i32_1 = arith.constant 0 : i32
    return %arg0, %c0_i32, %c0_i32_0 : i32, i32, i32
  }
  func.func @transform_2(%arg0: i32, %arg1: i32) -> (i32, i32, i32) {
    %c0_i32 = arith.constant 0 : i32
    %c0_i32_0 = arith.constant 0 : i32
    return %arg0, %c0_i32, %arg1 : i32, i32, i32
  }
}

</mosaic_0001>

<llo_original>
// kernel: tpu_custom_call.1
$region0: #{tpu_custom_call.1}
  #allocation0 [shape = 'u32[]', space=smem, size = 0x4, offset = 0x4, fixed_abs, tag = 'smem constant byte address 0x4 - core index']
  #allocation1 [shape = 'u32[72,128]{1,0:T(1,128)}', space=vmem, size = 0x9000, scoped, tag = 'internal scratch']
  %s0 = inlined_call_operand.vmem [shape: f32[12], index: 0, kind: input, shape index: {}]
  %s1 = inlined_call_operand.vmem [shape: f32[2,64,16], index: 1, kind: input, shape index: {}]
  %s2 = inlined_call_operand.hbm [shape: f32[2,4,256], index: 2, kind: output, shape index: {}]
  %s3 = sld [smem:[#allocation0]]
  $region45: #{tpu_custom_call.1} parent=0
    _
  %s5 = ssub.s32 1, %s3
  %s6 = scalar_select 0, %s5, %s3
  $region1: #{tpu_custom_call.1} parent=0
    #allocation2 [shape = 'u8[512]{0}', space=smem, size = 0x200, scoped, tag = 'input window, operand 0, single buffered']
    #allocation3 [shape = 's32[2]{0}', space=sflag, size = 0x8, scoped, tag = 'scoped memory for tpu_custom_call.1']
    #allocation4 [shape = 's32[2]{0}', space=sflag, size = 0x8, scoped, tag = 'scoped memory for tpu_custom_call.1']
    #allocation5 [shape = 'u8[8192]{0}', space=vmem, size = 0x2000, scoped, tag = 'output window, operand 0']
    %7 = vsyncpa [#allocation4], 0
    %8 = vsyncpa [#allocation3], 0
    %s9 = scalar_lea.sflag [#allocation3], 1
    %10 = vsyncpa %s9, 0
    loop: start=0, step=1, limit=4
    $region2: #{tpu_custom_call.1} parent=1 // loop_pre_header
      _
    $region3: #{tpu_custom_call.1} parent=1 // loop_header
      %s12 = sphi 0, %s16
      %p13 = scmp.ge.s32.totalorder %s12, 4
      %s19 = sphi 0, %s31
      %s20 = sphi 0, %s27
      %s21 = sphi 0, %s19
      %s22 = sphi 0, %s20
      %s23 = sphi 0, %s21
      %s24 = sphi 0, %s22
      %s32 = sphi 0, %s32
      %s34 = sphi 0, %s32
      %s35 = sphi 0, %s34
      %s49 = sphi 0, %s35
      %s55 = sphi 0, %s57
      %s58 = sphi 0, %s55
      %s59 = sphi 0, %s58
      %s75 = sphi 0, %s59
      %s83 = sphi 0, %s85
      %s86 = sphi 0, %s83
      %s87 = sphi 0, %s86
      %s103 = sphi 0, %s87
    $region4: #{tpu_custom_call.1} parent=1 // loop_header_branch
      %15 = sbr.rel (%p13) target = $region8
    $region5: #{tpu_custom_call.1} parent=1 // loop_body
      %s17 = ssub.s32 %s12, 1
      %s18 = ssub.s32 %s12, 2
      %s25 = sadd.s32 1, %s20
      %p26 = scmp.ge.s32.totalorder %s25, 1
      %s27 = scalar_select %p26, 0, %s25
      %s28 = sadd.s32 1, %s19
      %s29 = scalar_select %p26, %s28, %s19
      %p30 = scmp.ge.s32.totalorder %s29, 2
      %s31 = scalar_select %p30, 0, %s29
      %s33 = sadd.s32 %s32, 1
      %p36 = scmp.eq.s32.totalorder %s12, 1
      %p37 = scmp.ne.s32.totalorder %s32, %s34
      %p38 = scmp.eq.s32.totalorder %s12, 0
      %p39 = por %p37, %p38
      %p40 = scmp.ne.s32.totalorder %s32, %s34
      %p41 = scmp.eq.s32.totalorder %s17, 1
      %p42 = por %p40, %p41
      %p43 = scmp.ne.s32.totalorder %s34, %s35
      %p44 = scmp.eq.s32.totalorder %s17, 0
      %p45 = por %p43, %p44
      %p46 = scmp.ne.s32.totalorder %s34, %s35
      %p47 = scmp.eq.s32.totalorder %s18, 1
      %p48 = por %p46, %p47
      %p50 = scmp.ne.s32.totalorder %s35, %s49
      %p51 = scmp.eq.s32.totalorder %s18, 0
      %p52 = por %p50, %p51
      %s53 = ssub.s32 %s19, %s31
      %p54 = scmp.eq.s32.totalorder %s53, 0
      %s56 = sadd.s32 %s55, 1
      %s57 = scalar_select %p54, %s55, %s56
      %p60 = pneg %p54
      %p61 = scmp.eq.s32.totalorder %s12, 1
      %p62 = por %p60, %p61
      %p63 = scmp.ne.s32.totalorder %s55, %s58
      %p64 = scmp.eq.s32.totalorder %s12, 0
      %p65 = por %p63, %p64
      %p66 = scmp.ne.s32.totalorder %s55, %s58
      %p67 = scmp.eq.s32.totalorder %s17, 1
      %p68 = por %p66, %p67
      %p69 = scmp.ne.s32.totalorder %s58, %s59
      %p70 = scmp.eq.s32.totalorder %s17, 0
      %p71 = por %p69, %p70
      %p72 = scmp.ne.s32.totalorder %s58, %s59
      %p73 = scmp.eq.s32.totalorder %s18, 1
      %p74 = por %p72, %p73
      %p76 = scmp.ne.s32.totalorder %s59, %s75
      %p77 = scmp.eq.s32.totalorder %s18, 0
      %p78 = por %p76, %p77
      %s79 = ssub.s32 %s19, %s31
      %s80 = ssub.s32 %s20, %s27
      %s81 = sor.u32 %s79, %s80
      %p82 = scmp.eq.s32.totalorder %s81, 0
      %s84 = sadd.s32 %s83, 1
      %s85 = scalar_select %p82, %s83, %s84
      %p88 = pneg %p82
      %p89 = scmp.eq.s32.totalorder %s12, 1
      %p90 = por %p88, %p89
      %p91 = scmp.ne.s32.totalorder %s83, %s86
      %p92 = scmp.eq.s32.totalorder %s12, 0
      %p93 = por %p91, %p92
      %p94 = scmp.ne.s32.totalorder %s83, %s86
      %p95 = scmp.eq.s32.totalorder %s17, 1
      %p96 = por %p94, %p95
      %p97 = scmp.ne.s32.totalorder %s86, %s87
      %p98 = scmp.eq.s32.totalorder %s17, 0
      %p99 = por %p97, %p98
      %p100 = scmp.ne.s32.totalorder %s86, %s87
      %p101 = scmp.eq.s32.totalorder %s18, 1
      %p102 = por %p100, %p101
      %p104 = scmp.ne.s32.totalorder %s87, %s103
      %p105 = scmp.eq.s32.totalorder %s18, 0
      %p106 = por %p104, %p105
      %p107 = scmp.le.s32.totalorder 1, %s12
      %p108 = scmp.lt.s32.totalorder %s12, 3
      %p109 = pnand %p107, %p108
      %p110 = pneg %p109
      // Predicated region
      $region9: #{tpu_custom_call.1} parent=5 // pred_check
        _
      $region10: #{tpu_custom_call.1} parent=5 // pred_check_branch
        %112 = sbr.rel (%p109) target = $region12
      $region11: #{tpu_custom_call.1} parent=5 // pred_region
        %s113 = ssub.s32 %s12, 1
        // Predicated region
        $region13: #{tpu_custom_call.1} parent=11 // pred_check
          %p114 = pneg %p45
        $region14: #{tpu_custom_call.1} parent=11 // pred_check_branch
          %116 = sbr.rel (%p114) target = $region16
        $region15: #{tpu_custom_call.1} parent=11 // pred_region
          %118 = vsyncadd [#allocation4], 0
          %s120 = sshll.u32 %s0, 4
          %s121 = int_to_ptr.vmem [resolvable:$true] %s120
          %123 = dma.vmem_to_smem %s121, 16, [#allocation2], [#allocation4]
        $region16: #{tpu_custom_call.1} parent=11 // pred_fallthru
          _
      $region12: #{tpu_custom_call.1} parent=5 // pred_fallthru
        _
      %p124 = scmp.lt.s32.totalorder %s12, 2
      // Predicated region
      $region17: #{tpu_custom_call.1} parent=5 // pred_check
        %p125 = pneg %p124
      $region18: #{tpu_custom_call.1} parent=5 // pred_check_branch
        %127 = sbr.rel (%p125) target = $region20
      $region19: #{tpu_custom_call.1} parent=5 // pred_region
        // Predicated region
        $region21: #{tpu_custom_call.1} parent=19 // pred_check
          %p128 = pneg %p65
        $region22: #{tpu_custom_call.1} parent=19 // pred_check_branch
          %130 = sbr.rel (%p128) target = $region24
        $region23: #{tpu_custom_call.1} parent=19 // pred_region
          %p131 = scmp.lt.s32.totalorder %s19, 1
          %s132 = scalar_select %p131, %s19, 1
          %s133 = smul.addr %s132, 8
          %s134 = smul.addr %s133, 8
          %s135 = scalar_lea.vmem %s1, %s134
        $region24: #{tpu_custom_call.1} parent=19 // pred_fallthru
          _
      $region20: #{tpu_custom_call.1} parent=5 // pred_fallthru
        _
      %p136 = scmp.le.s32.totalorder 1, %s12
      %p137 = scmp.lt.s32.totalorder %s12, 3
      %p138 = pnand %p136, %p137
      %p139 = pneg %p138
      // Predicated region
      $region25: #{tpu_custom_call.1} parent=5 // pred_check
        _
      $region26: #{tpu_custom_call.1} parent=5 // pred_check_branch
        %141 = sbr.rel (%p138) target = $region28
      $region27: #{tpu_custom_call.1} parent=5 // pred_region
        %s142 = ssub.s32 %s12, 1
        // Predicated region
        $region29: #{tpu_custom_call.1} parent=27 // pred_check
          %p143 = pneg %p45
        $region30: #{tpu_custom_call.1} parent=27 // pred_check_branch
          %145 = sbr.rel (%p143) target = $region32
        $region31: #{tpu_custom_call.1} parent=27 // pred_region
          %147 = dma.done [#allocation4], 16
        $region32: #{tpu_custom_call.1} parent=27 // pred_fallthru
          _
        %148 = sfence
        %p149 = pneg %p45
        %p150 = pneg %p42
        %p151 = scmp.lt.s32.totalorder %s21, 1
        %s152 = scalar_select %p151, %s21, 1
        %s153 = smul.addr %s152, 8
        %s154 = smul.addr %s153, 8
        %s155 = scalar_lea.vmem %s1, %s154
        %p156 = pneg %p71
        %p157 = pneg %p68
        %p158 = pneg %p99
        %p159 = pneg %p96
        %s160 = sand.u32 %s86, 1
        %s161 = scalar_lea.sflag [#allocation3], %s160
        %s162 = sand.u32 %s86, 1
        %s163 = smul.addr %s162, 8
        %s164 = scalar_lea.vmem [#allocation5], %s163
        %p165 = scmp.lt.s32.totalorder %s21, 1
        %s166 = scalar_select %p165, %s21, 1
        %s167 = smul.addr %s166, 8
        %s168 = smul.addr %s167, 8
        %s169 = scalar_lea.vmem %s1, %s168
        %s170 = smul.u32 2, %s22
        %s171 = smul.u32 %s21, 6
        %s172 = sld [smem:[#allocation2 + %s171]]
        %s173 = sadd.s32 %s171, 1
        %s174 = sld [smem:[#allocation2 + %s173]]
        %s175 = sadd.s32 %s171, 2
        %s176 = sld [smem:[#allocation2 + %s175]]
        %s177 = sadd.s32 %s171, 3
        %s178 = sld [smem:[#allocation2 + %s177]]
        %s179 = sadd.s32 %s171, 4
        %s180 = sld [smem:[#allocation2 + %s179]]
        %s181 = sadd.s32 %s171, 5
        %s182 = sld [smem:[#allocation2 + %s181]]
        %s183 = smul.f32 %s172, -15.0
        %s184 = smul.f32 %s174, -15.0
        %s185 = sadd.f32 %s183, %s184
        %s186 = smul.f32 %s176, 16.0
        %s187 = sadd.f32 %s185, %s186
        %s188 = sadd.f32 %s187, 15.0
        %s189 = smul.f32 %s188, 0.5
        %s190 = smul.f32 %s178, -15.0
        %s191 = smul.f32 %s180, -15.0
        %s192 = sadd.f32 %s190, %s191
        %s193 = smul.f32 %s182, 16.0
        %s194 = sadd.f32 %s192, %s193
        %s195 = sadd.f32 %s194, 15.0
        %s196 = smul.f32 %s195, 0.5
        %s197 = smul.u32 %s22, 256
        %v198 = vlaneseq
        %v199 = vand.u32 %v198, 127
        %v200 = vadd.s32 %v199, 128
        %v201 = vstv %s197
        %v202 = vadd.s32 %v201, %v199
        %v203 = vadd.s32 %v201, %v200
        %v204 = vand.u32 %v202, 15
        %v205 = vand.u32 %v203, 15
        %v206 = vcvt.s32.f32 %v204
        %v207 = vcvt.s32.f32 %v205
        %v208 = vshra.s32 %v202, 4
        %v209 = vshra.s32 %v203, 4
        %v210 = vcvt.s32.f32 %v208
        %v211 = vcvt.s32.f32 %v209
        %v212 = vstv %s172
        %v213 = vmul.f32 %v212, %v206
        %v214 = vmul.f32 %v212, %v207
        %v215 = vstv %s174
        %v216 = vmul.f32 %v215, %v210
        %v217 = vmul.f32 %v215, %v211
        %v218 = vadd.f32 %v213, %v216
        %v219 = vadd.f32 %v214, %v217
        %v220 = vstv %s189
        %v221 = vadd.f32 %v218, %v220
        %v222 = vadd.f32 %v219, %v220
        %v223 = vstv %s178
        %v224 = vmul.f32 %v223, %v206
        %v225 = vmul.f32 %v223, %v207
        %v226 = vstv %s180
        %v227 = vmul.f32 %v226, %v210
        %v228 = vmul.f32 %v226, %v211
        %v229 = vadd.f32 %v224, %v227
        %v230 = vadd.f32 %v225, %v228
        %v231 = vstv %s196
        %v232 = vadd.f32 %v229, %v231
        %v233 = vadd.f32 %v230, %v231
        %v234 = vfloor.f32 %v221
        %v235 = vfloor.f32 %v222
        %v236 = vfloor.f32 %v232
        %v237 = vfloor.f32 %v233
        %v238 = vsub.f32 %v221, %v234
        %v239 = vsub.f32 %v222, %v235
        %v240 = vsub.f32 1.0, %v238
        %v241 = vsub.f32 1.0, %v239
        %v242 = vsub.f32 %v232, %v236
        %v243 = vsub.f32 %v233, %v237
        %v244 = vsub.f32 1.0, %v242
        %v245 = vsub.f32 1.0, %v243
        %vm246 = vcmp.ge.f32.partialorder %v234, 0.0
        %vm247 = vcmp.ge.f32.partialorder %v235, 0.0
        %vm248 = vcmp.le.f32.partialorder %v234, 15.0
        %vm249 = vcmp.le.f32.partialorder %v235, 15.0
        %vm250 = vmand %vm246, %vm248
        %vm251 = vmand %vm247, %vm249
        %v252 = vsel %vm250, %v240, 0.0
        %v253 = vsel %vm251, %v241, 0.0
        %vm254 = vcmp.ge.f32.partialorder %v234, -1.0
        %vm255 = vcmp.ge.f32.partialorder %v235, -1.0
        %vm256 = vcmp.le.f32.partialorder %v234, 14.0
        %vm257 = vcmp.le.f32.partialorder %v235, 14.0
        %vm258 = vmand %vm254, %vm256
        %vm259 = vmand %vm255, %vm257
        %v260 = vsel %vm258, %v238, 0.0
        %v261 = vsel %vm259, %v239, 0.0
        %vm262 = vcmp.ge.f32.partialorder %v236, 0.0
        %vm263 = vcmp.ge.f32.partialorder %v237, 0.0
        %vm264 = vcmp.le.f32.partialorder %v236, 15.0
        %vm265 = vcmp.le.f32.partialorder %v237, 15.0
        %vm266 = vmand %vm262, %vm264
        %vm267 = vmand %vm263, %vm265
        %v268 = vsel %vm266, %v244, 0.0
        %v269 = vsel %vm267, %v245, 0.0
        %vm270 = vcmp.ge.f32.partialorder %v236, -1.0
        %vm271 = vcmp.ge.f32.partialorder %v237, -1.0
        %vm272 = vcmp.le.f32.partialorder %v236, 14.0
        %vm273 = vcmp.le.f32.partialorder %v237, 14.0
        %vm274 = vmand %vm270, %vm272
        %vm275 = vmand %vm271, %vm273
        %v276 = vsel %vm274, %v242, 0.0
        %v277 = vsel %vm275, %v243, 0.0
        %v278 = vmax.f32 %v234, -1.0
        %v279 = vmax.f32 %v235, -1.0
        %v280 = vmin.f32 %v278, 16.0
        %v281 = vmin.f32 %v279, 16.0
        %v282 = vcvt.f32.s32.to.zero.pseudo %v280
        %v283 = vcvt.f32.s32.to.zero.pseudo %v281
        %v284 = vmax.f32 %v236, -1.0
        %v285 = vmax.f32 %v237, -1.0
        %v286 = vmin.f32 %v284, 16.0
        %v287 = vmin.f32 %v285, 16.0
        %v288 = vcvt.f32.s32.to.zero.pseudo %v286
        %v289 = vcvt.f32.s32.to.zero.pseudo %v287
        %v290 = vadd.s32 %v282, 1
        %v291 = vadd.s32 %v283, 1
        %v292 = vadd.s32 %v288, 1
        %v293 = vadd.s32 %v289, 1
        %v294 = vlaneseq
        %v295 = vshrl.u32 %v294, 7
        %v296 = vadd.s32 %v295, 8
        %vm297 = vcmp.eq.s32.totalorder %v295, %v282
        %vm298 = vcmp.eq.s32.totalorder %v295, %v283
        %vm299 = vcmp.eq.s32.totalorder %v296, %v282
        %vm300 = vcmp.eq.s32.totalorder %v296, %v283
        %v301 = vsel %vm297, %v252, 0.0
        %v302 = vsel %vm298, %v253, 0.0
        %v303 = vsel %vm299, %v252, 0.0
        %v304 = vsel %vm300, %v253, 0.0
        %vm305 = vcmp.eq.s32.totalorder %v295, %v290
        %vm306 = vcmp.eq.s32.totalorder %v295, %v291
        %vm307 = vcmp.eq.s32.totalorder %v296, %v290
        %vm308 = vcmp.eq.s32.totalorder %v296, %v291
        %v309 = vsel %vm305, %v260, 0.0
        %v310 = vsel %vm306, %v261, 0.0
        %v311 = vsel %vm307, %v260, 0.0
        %v312 = vsel %vm308, %v261, 0.0
        %v313 = vadd.f32 %v301, %v309
        %v314 = vadd.f32 %v302, %v310
        %v315 = vadd.f32 %v303, %v311
        %v316 = vadd.f32 %v304, %v312
        %vm317 = vcmp.eq.s32.totalorder %v295, %v288
        %vm318 = vcmp.eq.s32.totalorder %v295, %v289
        %vm319 = vcmp.eq.s32.totalorder %v296, %v288
        %vm320 = vcmp.eq.s32.totalorder %v296, %v289
        %v321 = vsel %vm317, %v268, 0.0
        %v322 = vsel %vm318, %v269, 0.0
        %v323 = vsel %vm319, %v268, 0.0
        %v324 = vsel %vm320, %v269, 0.0
        %vm325 = vcmp.eq.s32.totalorder %v295, %v292
        %vm326 = vcmp.eq.s32.totalorder %v295, %v293
        %vm327 = vcmp.eq.s32.totalorder %v296, %v292
        %vm328 = vcmp.eq.s32.totalorder %v296, %v293
        %v329 = vsel %vm325, %v276, 0.0
        %v330 = vsel %vm326, %v277, 0.0
        %v331 = vsel %vm327, %v276, 0.0
        %v332 = vsel %vm328, %v277, 0.0
        %v333 = vadd.f32 %v321, %v329
        %v334 = vadd.f32 %v322, %v330
        %v335 = vadd.f32 %v323, %v331
        %v336 = vadd.f32 %v324, %v332
        %v337 = vld [vmem:[%s169] sm:$0xff]
        %v338 = vld [vmem:[%s169 + $0x8] sm:$0xff]
        %v339 = vld [vmem:[%s169 + $0x10] sm:$0xff]
        %v340 = vld [vmem:[%s169 + $0x18] sm:$0xff]
        %v341 = vld [vmem:[%s169 + $0x20] sm:$0xff]
        %v342 = vld [vmem:[%s169 + $0x28] sm:$0xff]
        %v343 = vld [vmem:[%s169 + $0x30] sm:$0xff]
        %v344 = vld [vmem:[%s169 + $0x38] sm:$0xff]
        %vm345 = vcmask 130048
        %v347 = vsel %vm345, %v337, 0
        %v350 = vsel %vm345, %v338, 0
        %v353 = vsel %vm345, %v339, 0
        %v356 = vsel %vm345, %v340, 0
        %v359 = vsel %vm345, %v341, 0
        %v362 = vsel %vm345, %v342, 0
        %v365 = vsel %vm345, %v343, 0
        %v368 = vsel %vm345, %v344, 0
        %370 = vmatpush.msra.mxu0 0.0
        %371 = vmatpush.msra.mxu0 0.0
        %372 = vmatpush.msra.mxu0 0.0
        %373 = vmatpush.msra.mxu0 0.0
        %374 = vmatpush.msra.mxu0 0.0
        %375 = vmatpush.msra.mxu0 0.0
        %376 = vmatpush.msra.mxu0 0.0
        %377 = vmatpush.msra.mxu0 0.0
        %378 = vmatpush.msra.mxu0 0.0
        %379 = vmatpush.msra.mxu0 0.0
        %380 = vmatpush.msra.mxu0 0.0
        %381 = vmatpush.msra.mxu0 0.0
        %382 = vmatpush.msra.mxu0 0.0
        %383 = vmatpush.msra.mxu0 0.0
        %384 = vmatpush.msra.mxu0 %v315
        %385 = vmatpush.msra.mxu0 %v313
        %386 = vmatmul.f32.gmra.mxu0 %v347
        %v387 = vpop.f32.mrf.mxu0
        %v388 = vadd.f32 0.0, %v387
        %389 = vmatmul.f32.gmra.mxu0 %v350
        %v390 = vpop.f32.mrf.mxu0
        %v391 = vadd.f32 0.0, %v390
        %392 = vmatmul.f32.gmra.mxu0 %v353
        %v393 = vpop.f32.mrf.mxu0
        %v394 = vadd.f32 0.0, %v393
        %395 = vmatmul.f32.gmra.mxu0 %v356
        %v396 = vpop.f32.mrf.mxu0
        %v397 = vadd.f32 0.0, %v396
        %398 = vmatmul.f32.gmra.mxu0 %v359
        %v399 = vpop.f32.mrf.mxu0
        %v400 = vadd.f32 0.0, %v399
        %401 = vmatmul.f32.gmra.mxu0 %v362
        %v402 = vpop.f32.mrf.mxu0
        %v403 = vadd.f32 0.0, %v402
        %404 = vmatmul.f32.gmra.mxu0 %v365
        %v405 = vpop.f32.mrf.mxu0
        %v406 = vadd.f32 0.0, %v405
        %407 = vmatmul.f32.gmra.mxu0 %v368
        %v408 = vpop.f32.mrf.mxu0
        %v409 = vadd.f32 0.0, %v408
        %410 = vdwg.mxu0
        %411 = vmatpush.msra.mxu0 0.0
        %412 = vmatpush.msra.mxu0 0.0
        %413 = vmatpush.msra.mxu0 0.0
        %414 = vmatpush.msra.mxu0 0.0
        %415 = vmatpush.msra.mxu0 0.0
        %416 = vmatpush.msra.mxu0 0.0
        %417 = vmatpush.msra.mxu0 0.0
        %418 = vmatpush.msra.mxu0 0.0
        %419 = vmatpush.msra.mxu0 0.0
        %420 = vmatpush.msra.mxu0 0.0
        %421 = vmatpush.msra.mxu0 0.0
        %422 = vmatpush.msra.mxu0 0.0
        %423 = vmatpush.msra.mxu0 0.0
        %424 = vmatpush.msra.mxu0 0.0
        %425 = vmatpush.msra.mxu0 %v316
        %426 = vmatpush.msra.mxu0 %v314
        %427 = vmatmul.f32.gmra.mxu0 %v347
        %v428 = vpop.f32.mrf.mxu0
        %v429 = vadd.f32 0.0, %v428
        %430 = vmatmul.f32.gmra.mxu0 %v350
        %v431 = vpop.f32.mrf.mxu0
        %v432 = vadd.f32 0.0, %v431
        %433 = vmatmul.f32.gmra.mxu0 %v353
        %v434 = vpop.f32.mrf.mxu0
        %v435 = vadd.f32 0.0, %v434
        %436 = vmatmul.f32.gmra.mxu0 %v356
        %v437 = vpop.f32.mrf.mxu0
        %v438 = vadd.f32 0.0, %v437
        %439 = vmatmul.f32.gmra.mxu0 %v359
        %v440 = vpop.f32.mrf.mxu0
        %v441 = vadd.f32 0.0, %v440
        %442 = vmatmul.f32.gmra.mxu0 %v362
        %v443 = vpop.f32.mrf.mxu0
        %v444 = vadd.f32 0.0, %v443
        %445 = vmatmul.f32.gmra.mxu0 %v365
        %v446 = vpop.f32.mrf.mxu0
        %v447 = vadd.f32 0.0, %v446
        %448 = vmatmul.f32.gmra.mxu0 %v368
        %v449 = vpop.f32.mrf.mxu0
        %v450 = vadd.f32 0.0, %v449
        %451 = vdwg.mxu0
        %v452 = vmul.f32 %v388, %v333
        %v453 = vmul.f32 %v429, %v334
        %v454 = vmul.f32 %v391, %v335
        %v455 = vmul.f32 %v432, %v336
        %v456 = vmul.f32 %v394, %v333
        %v457 = vmul.f32 %v435, %v334
        %v458 = vmul.f32 %v397, %v335
        %v459 = vmul.f32 %v438, %v336
        %v460 = vmul.f32 %v400, %v333
        %v461 = vmul.f32 %v441, %v334
        %v462 = vmul.f32 %v403, %v335
        %v463 = vmul.f32 %v444, %v336
        %v464 = vmul.f32 %v406, %v333
        %v465 = vmul.f32 %v447, %v334
        %v466 = vmul.f32 %v409, %v335
        %v467 = vmul.f32 %v450, %v336
        %v468 = vadd.f32 %v452, %v454
        %v469 = vrot.slane %v468, 4
        %v470 = vadd.f32 %v468, %v469
        %v471 = vrot.slane %v470, 2
        %v472 = vadd.f32 %v470, %v471
        %v473 = vrot.slane %v472, 1
        %v474 = vadd.f32 %v472, %v473
        %v475 = vadd.f32 %v453, %v455
        %v476 = vrot.slane %v475, 4
        %v477 = vadd.f32 %v475, %v476
        %v478 = vrot.slane %v477, 2
        %v479 = vadd.f32 %v477, %v478
        %v480 = vrot.slane %v479, 1
        %v481 = vadd.f32 %v479, %v480
        %v482 = vadd.f32 %v456, %v458
        %v483 = vrot.slane %v482, 4
        %v484 = vadd.f32 %v482, %v483
        %v485 = vrot.slane %v484, 2
        %v486 = vadd.f32 %v484, %v485
        %v487 = vrot.slane %v486, 1
        %v488 = vadd.f32 %v486, %v487
        %v489 = vadd.f32 %v457, %v459
        %v490 = vrot.slane %v489, 4
        %v491 = vadd.f32 %v489, %v490
        %v492 = vrot.slane %v491, 2
        %v493 = vadd.f32 %v491, %v492
        %v494 = vrot.slane %v493, 1
        %v495 = vadd.f32 %v493, %v494
        %v496 = vadd.f32 %v460, %v462
        %v497 = vrot.slane %v496, 4
        %v498 = vadd.f32 %v496, %v497
        %v499 = vrot.slane %v498, 2
        %v500 = vadd.f32 %v498, %v499
        %v501 = vrot.slane %v500, 1
        %v502 = vadd.f32 %v500, %v501
        %v503 = vadd.f32 %v461, %v463
        %v504 = vrot.slane %v503, 4
        %v505 = vadd.f32 %v503, %v504
        %v506 = vrot.slane %v505, 2
        %v507 = vadd.f32 %v505, %v506
        %v508 = vrot.slane %v507, 1
        %v509 = vadd.f32 %v507, %v508
        %v510 = vadd.f32 %v464, %v466
        %v511 = vrot.slane %v510, 4
        %v512 = vadd.f32 %v510, %v511
        %v513 = vrot.slane %v512, 2
        %v514 = vadd.f32 %v512, %v513
        %v515 = vrot.slane %v514, 1
        %v516 = vadd.f32 %v514, %v515
        %v517 = vadd.f32 %v465, %v467
        %v518 = vrot.slane %v517, 4
        %v519 = vadd.f32 %v517, %v518
        %v520 = vrot.slane %v519, 2
        %v521 = vadd.f32 %v519, %v520
        %v522 = vrot.slane %v521, 1
        %v523 = vadd.f32 %v521, %v522
        %v532 = vrot.slane %v481, 4
        %v533 = vrot.slane %v495, 4
        %v534 = vrot.slane %v509, 4
        %v535 = vrot.slane %v523, 4
        %vm536 = vcmask 1043456
        %v537 = vsel %vm536, %v474, %v532
        %v538 = vsel %vm536, %v488, %v533
        %v539 = vsel %vm536, %v502, %v534
        %v540 = vsel %vm536, %v516, %v535
        %v541 = vrot.slane %v538, 7
        %vm542 = vcmask 1041409
        %v543 = vsel %vm542, %v541, %v537
        %vm544 = vcmask 1045509
        %v545 = vsel %vm544, %v541, %v543
        %v546 = vrot.slane %v539, 6
        %vm547 = vcmask 1042434
        %v548 = vsel %vm547, %v546, %v545
        %vm549 = vcmask 1046534
        %v550 = vsel %vm549, %v546, %v548
        %v551 = vrot.slane %v540, 5
        %vm552 = vcmask 1043459
        %v553 = vsel %vm552, %v551, %v550
        %vm554 = vcmask 1047559
        %v555 = vsel %vm554, %v551, %v553
        %557 = vst [vmem:[%s164] sm:$0xff] %v555
        %s558 = sand.u32 %s86, 1
        %s559 = scalar_lea.sflag [#allocation3], %s558
        %s560 = sand.u32 %s86, 1
        %s561 = smul.addr %s560, 8
        %s562 = scalar_lea.vmem [#allocation5], %s561
        // Predicated region
        $region33: #{tpu_custom_call.1} parent=27 // pred_check
          %p563 = pneg %p96
        $region34: #{tpu_custom_call.1} parent=27 // pred_check_branch
          %565 = sbr.rel (%p563) target = $region36
        $region35: #{tpu_custom_call.1} parent=27 // pred_region
          %s566 = smul.u32 2, %s22
          %568 = vsyncadd %s559, 0
          %s569 = smul.addr %s21, 2
          %s570 = sadd.s32 %s566, %s569
          %s571 = smul.addr %s570, 4
          %s572 = scalar_lea.hbm %s2, %s571
          %s574 = sshll.u32 %s562, 4
          %s575 = int_to_ptr.vmem [resolvable:$true] %s574
          %s576 = sshll.u32 %s572, 4
          %s577 = int_to_ptr.hbm [resolvable:$true] %s576
          %579 = dma.vmem_to_hbm [thread:$0]  %s575, 128, %s577, %s559
        $region36: #{tpu_custom_call.1} parent=27 // pred_fallthru
          _
      $region28: #{tpu_custom_call.1} parent=5 // pred_fallthru
        _
      %p580 = scmp.le.s32.totalorder 2, %s12
      // Predicated region
      $region37: #{tpu_custom_call.1} parent=5 // pred_check
        %p581 = pneg %p580
      $region38: #{tpu_custom_call.1} parent=5 // pred_check_branch
        %583 = sbr.rel (%p581) target = $region40
      $region39: #{tpu_custom_call.1} parent=5 // pred_region
        %s584 = ssub.s32 %s12, 2
        // Predicated region
        $region41: #{tpu_custom_call.1} parent=39 // pred_check
          %p585 = pneg %p102
        $region42: #{tpu_custom_call.1} parent=39 // pred_check_branch
          %587 = sbr.rel (%p585) target = $region44
        $region43: #{tpu_custom_call.1} parent=39 // pred_region
          %s588 = sand.u32 %s87, 1
          %s589 = scalar_lea.sflag [#allocation3], %s588
          %s590 = sand.u32 %s87, 1
          %s591 = smul.addr %s590, 8
          %s592 = scalar_lea.vmem [#allocation5], %s591
          %594 = dma.done %s589, 128
        $region44: #{tpu_custom_call.1} parent=39 // pred_fallthru
          _
      $region40: #{tpu_custom_call.1} parent=5 // pred_fallthru
        _
    $region6: #{tpu_custom_call.1} parent=1 // loop_footer
      %s16 = sadd.s32 1, %s12
    $region7: #{tpu_custom_call.1} parent=1 // loop_footer_branch
      %11 = sbr.rel target = $region3
    $region8: #{tpu_custom_call.1} parent=1 // loop_exit
      _
    %595 = vsyncpa [#allocation3], 1
    %s596 = scalar_lea.sflag [#allocation3], 1
    %597 = vsyncpa %s596, 1
    %598 = vsyncpa [#allocation4], 1
    %s599 = scalar_lea.sflag [#allocation4], 1
    %600 = vsyncpa %s599, 1

</llo_original>
